<compile_context>
chip_gen: v5e
topology: v5e:2x2
jax: 0.10.0
libtpu: 0.0.40
codegen_flags: <defaults>
</compile_context>

<pallas_src>
import jax
import jax.numpy as jnp
import numpy as np
from jax.experimental import pallas as pl
from jax.experimental.pallas import tpu as pltpu


MAX_TILE_N = 1024   # lane tile over num_time_slots (N); 512-2048 per review
LOG_CHUNK = 8       # sublane chunk for log-of-products (keep <= 8-16)


def _round_up(x, m):
    return ((x + m - 1) // m) * m


def _choose_tile(n):
    """Full-width tile for tiny N, else MAX_TILE_N (=> >=2 grid steps)."""
    n128 = _round_up(max(int(n), 1), 128)
    return n128 if n128 <= MAX_TILE_N else MAX_TILE_N


def _compiler_params(block_bytes):
    # Double-buffered blocks + headroom; explicit limit for v7x's 64 MiB VMEM.
    need = 4 * int(block_bytes)
    limit = int(min(max(need, 32 * 1024 * 1024), 64 * 1024 * 1024))
    return pltpu.CompilerParams(
        dimension_semantics=("parallel",), vmem_limit_bytes=limit)


# --------------------------------------------------------------------------
# Kernels
# --------------------------------------------------------------------------
def _setup_kernel(scalar_ref, times_ref, tde_ref, decay_ref):
    """Fused setup.  Layout: L (history_length) on sublanes, N on lanes.

      times_ref : (L, TILE_N) f32
      tde_ref   : (L, TILE_N) f32/bf16   times_delta_exp
      decay_ref : (1, TILE_N) f32        sum_j (1 - exp(-omega*(final_T - t_j)))
    """
    omega = scalar_ref[0]
    final_t = scalar_ref[2]
    t = times_ref[...]                                           # (L, TILE_N)

    # Hoisted decay sum (parameter independent).
    decay_ref[...] = jnp.sum(1.0 - jnp.exp(-omega * (final_t - t)),
                             axis=0, keepdims=True)              # (1, TILE_N)

    # times_delta_exp[j, n] = sum_k exp(-omega*(t[j,n]-t[k,n]))  for t[j,n]>t[k,n]
    # Hoist s = omega*t; per row only a subtract, a select and an exp.
    # TODO(synk): for large L, switch to the sorted-prefix cumsum factorization.
    s = omega * t
    length = t.shape[0]
    acc = jnp.zeros_like(t)
    for k in range(length):                                      # static trip count
        d = s[k:k + 1, :] - s                                    # = -omega*(t - t_k)
        acc = acc + jnp.exp(jnp.where(d < 0.0, d, -jnp.inf))     # mask: t > t_k
    tde_ref[...] = acc.astype(tde_ref.dtype)


def _fwd_kernel(scalar_ref, params_ref, tde_ref, out_ref):
    """NLL forward.  All operands lane-dense over N.

      params_ref : (8, TILE_N) f32   rows: 0=mu, 1=alpha, 2=decay, 3..7 pad(=1)
      tde_ref    : (L, TILE_N) f32/bf16
      out_ref    : (1, TILE_N) f32
    """
    inv_omega = scalar_ref[1]
    final_t = scalar_ref[2]
    mu = params_ref[0:1, :]
    alpha = params_ref[1:2, :]
    decay = params_ref[2:3, :]

    x = mu + alpha * tde_ref[...].astype(jnp.float32)            # (L, TILE_N)

    # log-of-chunked-products: sum_j log(x_j) == sum_chunks log(prod_chunk x_j)
    # -> ~L/8 EUP logs instead of L, rest is cheap VPU multiplies.
    length = x.shape[0]
    summed = jnp.zeros_like(mu)                                  # (1, TILE_N)
    for c0 in range(0, length, LOG_CHUNK):
        c1 = min(c0 + LOG_CHUNK, length)
        prod = x[c0:c0 + 1, :]
        for r in range(c0 + 1, c1):
            prod = prod * x[r:r + 1, :]
        summed = summed + jnp.log(prod)

    alpha_term = alpha * inv_omega * decay
    out_ref[...] = -(summed - alpha_term - mu * final_t)


# --------------------------------------------------------------------------
# Wrappers
# --------------------------------------------------------------------------
def _pad_cols(x, n_pad, fill):
    n = x.shape[-1]
    if n == n_pad:
        return x
    pad = jnp.full(x.shape[:-1] + (n_pad - n,), fill, x.dtype)
    return jnp.concatenate([x, pad], axis=-1)


def _setup_pallas(scalars, times_t, tile_n, tde_dtype):
    length, n_pad = times_t.shape
    block_bytes = length * tile_n * 4 * 2 + tile_n * 4
    return pl.pallas_call(
        _setup_kernel,
        out_shape=(
            jax.ShapeDtypeStruct((length, n_pad), tde_dtype),    # times_delta_exp
            jax.ShapeDtypeStruct((1, n_pad), jnp.float32),       # decay_sum
        ),
        grid=(n_pad // tile_n,),
        in_specs=[
            pl.BlockSpec(memory_space=pltpu.MemorySpace.SMEM),   # scalars
            pl.BlockSpec((length, tile_n), lambda i: (0, i)),    # times (L, N)
        ],
        out_specs=(
            pl.BlockSpec((length, tile_n), lambda i: (0, i)),
            pl.BlockSpec((1, tile_n), lambda i: (0, i)),
        ),
        compiler_params=_compiler_params(block_bytes),
    )(scalars, times_t)


def pack_params(mu, alpha, decay, n_pad):
    """One-time packing of mu/alpha/decay into a sublane-padded (8, N_pad) slab.

    Padded lanes/rows are 1.0 so log() stays finite in the kernel.
    """
    n = mu.reshape(-1).shape[0]
    slab = jnp.ones((8, n_pad), jnp.float32)
    slab = slab.at[0, :n].set(mu.reshape(-1).astype(jnp.float32))
    slab = slab.at[1, :n].set(alpha.reshape(-1).astype(jnp.float32))
    slab = slab.at[2, :].set(decay.reshape(-1).astype(jnp.float32))
    return slab


def hawkes_nll_forward(params_slab, tde_t, scalars, n, tile_n):
    """Forward pass; returns (N, 1) f32 (module semantics)."""
    length, n_pad = tde_t.shape
    block_bytes = (8 * tile_n * 4
                   + length * tile_n * jnp.dtype(tde_t.dtype).itemsize
                   + tile_n * 4)
    out = pl.pallas_call(
        _fwd_kernel,
        out_shape=jax.ShapeDtypeStruct((1, n_pad), jnp.float32),
        grid=(n_pad // tile_n,),
        in_specs=[
            pl.BlockSpec(memory_space=pltpu.MemorySpace.SMEM),   # scalars
            pl.BlockSpec((8, tile_n), lambda i: (0, i)),         # mu/alpha/decay
            pl.BlockSpec((length, tile_n), lambda i: (0, i)),    # times_delta_exp
        ],
        out_specs=pl.BlockSpec((1, tile_n), lambda i: (0, i)),
        compiler_params=_compiler_params(block_bytes),
    )(scalars, params_slab, tde_t)
    return out[0, :n].reshape(n, 1)


def build_model_state(history_time_slots, next_time_slot, omega,
                      tde_dtype=jnp.float32):
    """Replicates Model.__init__ (setup), heavy parts in Pallas.

    Setup and forward stay split because mu/alpha are trainable parameters
    (forward is typically called many times per dataset).
    """
    history = jnp.asarray(history_time_slots, jnp.float32).reshape(1, -1)  # (1, H)
    next_ts = jnp.asarray(next_time_slot, jnp.float32).reshape(-1, 1)      # (N, 1)
    n = next_ts.shape[0]
    epsilon = 1.0
    final_t = jnp.max(next_ts) + epsilon            # stays on device; no recompile

    times = jnp.concatenate(
        (jnp.tile(history, (n, 1)), next_ts), axis=1
    ).astype(jnp.float32)                           # (N, L)

    tile_n = _choose_tile(n)
    n_pad = _round_up(n, tile_n)
    times_t = _pad_cols(times.T, n_pad, 0.0)        # (L, N_pad) lane-dense

    # SMEM scalar block: [omega, 1/omega, final_T]
    scalars = jnp.stack([
        jnp.float32(omega),
        jnp.float32(1.0 / float(omega)),
        final_t.astype(jnp.float32),
    ])

    tde_t, decay = _setup_pallas(scalars, times_t, tile_n, tde_dtype)

    # Parameters: mu = alpha = ones, shape (N, 1); packed once (not per call).
    mu = jnp.ones((n, 1), jnp.float32)
    alpha = jnp.ones((n, 1), jnp.float32)
    params_slab = pack_params(mu, alpha, decay, n_pad)

    return dict(mu=mu, alpha=alpha, params_slab=params_slab, tde_t=tde_t,
                scalars=scalars, times=times, final_t=final_t,
                n=n, tile_n=tile_n)


# --------------------------------------------------------------------------
# Pure-JAX reference (mirrors the PyTorch module end-to-end)
# --------------------------------------------------------------------------
def reference_forward(mu, alpha, times, omega, final_t):
    td = times[:, :, None] - times[:, None, :]
    td = jnp.where(td <= 0, jnp.inf, td) * omega
    tde = jnp.exp(-td).sum(axis=2)
    summed = jnp.sum(jnp.log(mu + alpha * tde), axis=1, keepdims=True)
    alpha_term = alpha / omega * jnp.sum(
        1.0 - jnp.exp(-omega * (final_t - times)), axis=1, keepdims=True)
    values = summed - alpha_term - mu * final_t
    return -values


if __name__ == "__main__":
    key = jax.random.PRNGKey(0)
    k1, k2 = jax.random.split(key)

    # Small synthetic problem: history of 15 events, 8 candidate next slots.
    num_time_slots = 8          # N
    history_len = 15            # H  -> history_length L = H + 1 = 16
    omega = 2.0

    history_time_slots = jnp.sort(
        jax.random.uniform(k1, (history_len,), dtype=jnp.float32) * 10.0
    )
    next_time_slot = 10.0 + jax.random.uniform(
        k2, (num_time_slots,), dtype=jnp.float32
    ) * 5.0

    # ---- f32 tde path (bit-faithful to the module; tight tolerance) ----
    state = build_model_state(history_time_slots, next_time_slot, omega,
                              tde_dtype=jnp.float32)
    out = hawkes_nll_forward(
        state["params_slab"], state["tde_t"], state["scalars"],
        state["n"], state["tile_n"],
    )
    out = jax.block_until_ready(out)

    ref = reference_forward(
        state["mu"], state["alpha"], state["times"], omega, state["final_t"]
    )
    np.testing.assert_allclose(
        np.asarray(out), np.asarray(ref), rtol=1e-5, atol=1e-4
    )

    # ---- bf16 tde path (halves HBM traffic on v5e/v6e; looser tolerance) ----
    state_bf16 = build_model_state(history_time_slots, next_time_slot, omega,
                                   tde_dtype=jnp.bfloat16)
    out_bf16 = hawkes_nll_forward(
        state_bf16["params_slab"], state_bf16["tde_t"], state_bf16["scalars"],
        state_bf16["n"], state_bf16["tile_n"],
    )
    out_bf16 = jax.block_until_ready(out_bf16)
    np.testing.assert_allclose(
        np.asarray(out_bf16), np.asarray(ref), rtol=2e-2, atol=1e-1
    )

    print("KERNEL_OK")
</pallas_src>

<mosaic_0001>
module attributes {stable_mosaic.version = 11 : i64} {
  func.func @_setup_kernel(%arg0: i32, %arg1: memref<3xf32, #tpu.memory_space<smem>>, %arg2: memref<16x128xf32, #tpu.memory_space<vmem>>, %arg3: memref<16x128xf32, #tpu.memory_space<vmem>>, %arg4: memref<1x128xf32, #tpu.memory_space<vmem>>) attributes {dimension_semantics = [#tpu.dimension_semantics<parallel>], iteration_bounds = array<i64: 1>, scalar_prefetch = 0 : i64, scratch_operands = 0 : i64, tpu.core_type = #tpu.core_type<tc>, window_params = [{transform_indices = @transform_0, window_bounds = array<i64: 3>}, {transform_indices = @transform_1, window_bounds = array<i64: 16, 128>}, {transform_indices = @transform_2, window_bounds = array<i64: 16, 128>}, {transform_indices = @transform_3, window_bounds = array<i64: 1, 128>}]} {
    %c0 = arith.constant 0 : index
    %0 = memref.load %arg1[%c0] : memref<3xf32, #tpu.memory_space<smem>>
    %c2 = arith.constant 2 : index
    %1 = memref.load %arg1[%c2] : memref<3xf32, #tpu.memory_space<smem>>
    %c0_0 = arith.constant 0 : index
    %c0_1 = arith.constant 0 : index
    %2 = vector.load %arg2[%c0_0, %c0_1] : memref<16x128xf32, #tpu.memory_space<vmem>>, vector<16x128xf32>
    %cst = arith.constant 0.000000e+00 : f32
    %3 = arith.subf %cst, %0 : f32
    %4 = vector.broadcast %1 : f32 to vector<16x128xf32>
    %5 = arith.subf %4, %2 : vector<16x128xf32>
    %6 = vector.broadcast %3 : f32 to vector<16x128xf32>
    %7 = arith.mulf %6, %5 : vector<16x128xf32>
    %8 = math.exp %7 : vector<16x128xf32>
    %cst_2 = arith.constant 1.000000e+00 : f32
    %9 = vector.broadcast %cst_2 : f32 to vector<16x128xf32>
    %10 = arith.subf %9, %8 : vector<16x128xf32>
    %cst_3 = arith.constant dense<0.000000e+00> : vector<128xf32>
    %11 = vector.multi_reduction <add>, %10, %cst_3 [0] : vector<16x128xf32> to vector<128xf32>
    %12 = vector.shape_cast %11 : vector<128xf32> to vector<1x128xf32>
    %c0_4 = arith.constant 0 : index
    %c0_5 = arith.constant 0 : index
    %13 = vector.load %arg4[%c0_4, %c0_5] : memref<1x128xf32, #tpu.memory_space<vmem>>, vector<1x128xf32>
    tpu.vector_store %arg4[%c0_4, %c0_5], %12 {strides = array<i32>} : memref<1x128xf32, #tpu.memory_space<vmem>>, vector<1x128xf32>,
    %14 = vector.broadcast %0 : f32 to vector<16x128xf32>
    %15 = arith.mulf %14, %2 : vector<16x128xf32>
    %cst_6 = arith.constant 0.000000e+00 : f32
    %16 = vector.broadcast %cst_6 : f32 to vector<16x128xf32>
    %17 = vector.extract_strided_slice %15 {offsets = [0, 0], sizes = [1, 128], strides = [1, 1]} : vector<16x128xf32> to vector<1x128xf32>
    %18 = vector.broadcast %17 : vector<1x128xf32> to vector<16x128xf32>
    %19 = arith.subf %18, %15 : vector<16x128xf32>
    %cst_7 = arith.constant 0.000000e+00 : f32
    %20 = vector.broadcast %cst_7 : f32 to vector<16x128xf32>
    %21 = arith.cmpf olt, %19, %20 : vector<16x128xf32>
    %cst_8 = arith.constant 0xFF800000 : f32
    %22 = vector.broadcast %cst_8 : f32 to vector<16x128xf32>
    %23 = arith.select %21, %19, %22 : vector<16x128xi1>, vector<16x128xf32>
    %24 = math.exp %23 : vector<16x128xf32>
    %25 = arith.addf %16, %24 : vector<16x128xf32>
    %26 = vector.extract_strided_slice %15 {offsets = [1, 0], sizes = [1, 128], strides = [1, 1]} : vector<16x128xf32> to vector<1x128xf32>
    %27 = vector.broadcast %26 : vector<1x128xf32> to vector<16x128xf32>
    %28 = arith.subf %27, %15 : vector<16x128xf32>
    %cst_9 = arith.constant 0.000000e+00 : f32
    %29 = vector.broadcast %cst_9 : f32 to vector<16x128xf32>
    %30 = arith.cmpf olt, %28, %29 : vector<16x128xf32>
    %cst_10 = arith.constant 0xFF800000 : f32
    %31 = vector.broadcast %cst_10 : f32 to vector<16x128xf32>
    %32 = arith.select %30, %28, %31 : vector<16x128xi1>, vector<16x128xf32>
    %33 = math.exp %32 : vector<16x128xf32>
    %34 = arith.addf %25, %33 : vector<16x128xf32>
    %35 = vector.extract_strided_slice %15 {offsets = [2, 0], sizes = [1, 128], strides = [1, 1]} : vector<16x128xf32> to vector<1x128xf32>
    %36 = vector.broadcast %35 : vector<1x128xf32> to vector<16x128xf32>
    %37 = arith.subf %36, %15 : vector<16x128xf32>
    %cst_11 = arith.constant 0.000000e+00 : f32
    %38 = vector.broadcast %cst_11 : f32 to vector<16x128xf32>
    %39 = arith.cmpf olt, %37, %38 : vector<16x128xf32>
    %cst_12 = arith.constant 0xFF800000 : f32
    %40 = vector.broadcast %cst_12 : f32 to vector<16x128xf32>
    %41 = arith.select %39, %37, %40 : vector<16x128xi1>, vector<16x128xf32>
    %42 = math.exp %41 : vector<16x128xf32>
    %43 = arith.addf %34, %42 : vector<16x128xf32>
    %44 = vector.extract_strided_slice %15 {offsets = [3, 0], sizes = [1, 128], strides = [1, 1]} : vector<16x128xf32> to vector<1x128xf32>
    %45 = vector.broadcast %44 : vector<1x128xf32> to vector<16x128xf32>
    %46 = arith.subf %45, %15 : vector<16x128xf32>
    %cst_13 = arith.constant 0.000000e+00 : f32
    %47 = vector.broadcast %cst_13 : f32 to vector<16x128xf32>
    %48 = arith.cmpf olt, %46, %47 : vector<16x128xf32>
    %cst_14 = arith.constant 0xFF800000 : f32
    %49 = vector.broadcast %cst_14 : f32 to vector<16x128xf32>
    %50 = arith.select %48, %46, %49 : vector<16x128xi1>, vector<16x128xf32>
    %51 = math.exp %50 : vector<16x128xf32>
    %52 = arith.addf %43, %51 : vector<16x128xf32>
    %53 = vector.extract_strided_slice %15 {offsets = [4, 0], sizes = [1, 128], strides = [1, 1]} : vector<16x128xf32> to vector<1x128xf32>
    %54 = vector.broadcast %53 : vector<1x128xf32> to vector<16x128xf32>
    %55 = arith.subf %54, %15 : vector<16x128xf32>
    %cst_15 = arith.constant 0.000000e+00 : f32
    %56 = vector.broadcast %cst_15 : f32 to vector<16x128xf32>
    %57 = arith.cmpf olt, %55, %56 : vector<16x128xf32>
    %cst_16 = arith.constant 0xFF800000 : f32
    %58 = vector.broadcast %cst_16 : f32 to vector<16x128xf32>
    %59 = arith.select %57, %55, %58 : vector<16x128xi1>, vector<16x128xf32>
    %60 = math.exp %59 : vector<16x128xf32>
    %61 = arith.addf %52, %60 : vector<16x128xf32>
    %62 = vector.extract_strided_slice %15 {offsets = [5, 0], sizes = [1, 128], strides = [1, 1]} : vector<16x128xf32> to vector<1x128xf32>
    %63 = vector.broadcast %62 : vector<1x128xf32> to vector<16x128xf32>
    %64 = arith.subf %63, %15 : vector<16x128xf32>
    %cst_17 = arith.constant 0.000000e+00 : f32
    %65 = vector.broadcast %cst_17 : f32 to vector<16x128xf32>
    %66 = arith.cmpf olt, %64, %65 : vector<16x128xf32>
    %cst_18 = arith.constant 0xFF800000 : f32
    %67 = vector.broadcast %cst_18 : f32 to vector<16x128xf32>
    %68 = arith.select %66, %64, %67 : vector<16x128xi1>, vector<16x128xf32>
    %69 = math.exp %68 : vector<16x128xf32>
    %70 = arith.addf %61, %69 : vector<16x128xf32>
    %71 = vector.extract_strided_slice %15 {offsets = [6, 0], sizes = [1, 128], strides = [1, 1]} : vector<16x128xf32> to vector<1x128xf32>
    %72 = vector.broadcast %71 : vector<1x128xf32> to vector<16x128xf32>
    %73 = arith.subf %72, %15 : vector<16x128xf32>
    %cst_19 = arith.constant 0.000000e+00 : f32
    %74 = vector.broadcast %cst_19 : f32 to vector<16x128xf32>
    %75 = arith.cmpf olt, %73, %74 : vector<16x128xf32>
    %cst_20 = arith.constant 0xFF800000 : f32
    %76 = vector.broadcast %cst_20 : f32 to vector<16x128xf32>
    %77 = arith.select %75, %73, %76 : vector<16x128xi1>, vector<16x128xf32>
    %78 = math.exp %77 : vector<16x128xf32>
    %79 = arith.addf %70, %78 : vector<16x128xf32>
    %80 = vector.extract_strided_slice %15 {offsets = [7, 0], sizes = [1, 128], strides = [1, 1]} : vector<16x128xf32> to vector<1x128xf32>
    %81 = vector.broadcast %80 : vector<1x128xf32> to vector<16x128xf32>
    %82 = arith.subf %81, %15 : vector<16x128xf32>
    %cst_21 = arith.constant 0.000000e+00 : f32
    %83 = vector.broadcast %cst_21 : f32 to vector<16x128xf32>
    %84 = arith.cmpf olt, %82, %83 : vector<16x128xf32>
    %cst_22 = arith.constant 0xFF800000 : f32
    %85 = vector.broadcast %cst_22 : f32 to vector<16x128xf32>
    %86 = arith.select %84, %82, %85 : vector<16x128xi1>, vector<16x128xf32>
    %87 = math.exp %86 : vector<16x128xf32>
    %88 = arith.addf %79, %87 : vector<16x128xf32>
    %89 = vector.extract_strided_slice %15 {offsets = [8, 0], sizes = [1, 128], strides = [1, 1]} : vector<16x128xf32> to vector<1x128xf32>
    %90 = vector.broadcast %89 : vector<1x128xf32> to vector<16x128xf32>
    %91 = arith.subf %90, %15 : vector<16x128xf32>
    %cst_23 = arith.constant 0.000000e+00 : f32
    %92 = vector.broadcast %cst_23 : f32 to vector<16x128xf32>
    %93 = arith.cmpf olt, %91, %92 : vector<16x128xf32>
    %cst_24 = arith.constant 0xFF800000 : f32
    %94 = vector.broadcast %cst_24 : f32 to vector<16x128xf32>
    %95 = arith.select %93, %91, %94 : vector<16x128xi1>, vector<16x128xf32>
    %96 = math.exp %95 : vector<16x128xf32>
    %97 = arith.addf %88, %96 : vector<16x128xf32>
    %98 = vector.extract_strided_slice %15 {offsets = [9, 0], sizes = [1, 128], strides = [1, 1]} : vector<16x128xf32> to vector<1x128xf32>
    %99 = vector.broadcast %98 : vector<1x128xf32> to vector<16x128xf32>
    %100 = arith.subf %99, %15 : vector<16x128xf32>
    %cst_25 = arith.constant 0.000000e+00 : f32
    %101 = vector.broadcast %cst_25 : f32 to vector<16x128xf32>
    %102 = arith.cmpf olt, %100, %101 : vector<16x128xf32>
    %cst_26 = arith.constant 0xFF800000 : f32
    %103 = vector.broadcast %cst_26 : f32 to vector<16x128xf32>
    %104 = arith.select %102, %100, %103 : vector<16x128xi1>, vector<16x128xf32>
    %105 = math.exp %104 : vector<16x128xf32>
    %106 = arith.addf %97, %105 : vector<16x128xf32>
    %107 = vector.extract_strided_slice %15 {offsets = [10, 0], sizes = [1, 128], strides = [1, 1]} : vector<16x128xf32> to vector<1x128xf32>
    %108 = vector.broadcast %107 : vector<1x128xf32> to vector<16x128xf32>
    %109 = arith.subf %108, %15 : vector<16x128xf32>
    %cst_27 = arith.constant 0.000000e+00 : f32
    %110 = vector.broadcast %cst_27 : f32 to vector<16x128xf32>
    %111 = arith.cmpf olt, %109, %110 : vector<16x128xf32>
    %cst_28 = arith.constant 0xFF800000 : f32
    %112 = vector.broadcast %cst_28 : f32 to vector<16x128xf32>
    %113 = arith.select %111, %109, %112 : vector<16x128xi1>, vector<16x128xf32>
    %114 = math.exp %113 : vector<16x128xf32>
    %115 = arith.addf %106, %114 : vector<16x128xf32>
    %116 = vector.extract_strided_slice %15 {offsets = [11, 0], sizes = [1, 128], strides = [1, 1]} : vector<16x128xf32> to vector<1x128xf32>
    %117 = vector.broadcast %116 : vector<1x128xf32> to vector<16x128xf32>
    %118 = arith.subf %117, %15 : vector<16x128xf32>
    %cst_29 = arith.constant 0.000000e+00 : f32
    %119 = vector.broadcast %cst_29 : f32 to vector<16x128xf32>
    %120 = arith.cmpf olt, %118, %119 : vector<16x128xf32>
    %cst_30 = arith.constant 0xFF800000 : f32
    %121 = vector.broadcast %cst_30 : f32 to vector<16x128xf32>
    %122 = arith.select %120, %118, %121 : vector<16x128xi1>, vector<16x128xf32>
    %123 = math.exp %122 : vector<16x128xf32>
    %124 = arith.addf %115, %123 : vector<16x128xf32>
    %125 = vector.extract_strided_slice %15 {offsets = [12, 0], sizes = [1, 128], strides = [1, 1]} : vector<16x128xf32> to vector<1x128xf32>
    %126 = vector.broadcast %125 : vector<1x128xf32> to vector<16x128xf32>
    %127 = arith.subf %126, %15 : vector<16x128xf32>
    %cst_31 = arith.constant 0.000000e+00 : f32
    %128 = vector.broadcast %cst_31 : f32 to vector<16x128xf32>
    %129 = arith.cmpf olt, %127, %128 : vector<16x128xf32>
    %cst_32 = arith.constant 0xFF800000 : f32
    %130 = vector.broadcast %cst_32 : f32 to vector<16x128xf32>
    %131 = arith.select %129, %127, %130 : vector<16x128xi1>, vector<16x128xf32>
    %132 = math.exp %131 : vector<16x128xf32>
    %133 = arith.addf %124, %132 : vector<16x128xf32>
    %134 = vector.extract_strided_slice %15 {offsets = [13, 0], sizes = [1, 128], strides = [1, 1]} : vector<16x128xf32> to vector<1x128xf32>
    %135 = vector.broadcast %134 : vector<1x128xf32> to vector<16x128xf32>
    %136 = arith.subf %135, %15 : vector<16x128xf32>
    %cst_33 = arith.constant 0.000000e+00 : f32
    %137 = vector.broadcast %cst_33 : f32 to vector<16x128xf32>
    %138 = arith.cmpf olt, %136, %137 : vector<16x128xf32>
    %cst_34 = arith.constant 0xFF800000 : f32
    %139 = vector.broadcast %cst_34 : f32 to vector<16x128xf32>
    %140 = arith.select %138, %136, %139 : vector<16x128xi1>, vector<16x128xf32>
    %141 = math.exp %140 : vector<16x128xf32>
    %142 = arith.addf %133, %141 : vector<16x128xf32>
    %143 = vector.extract_strided_slice %15 {offsets = [14, 0], sizes = [1, 128], strides = [1, 1]} : vector<16x128xf32> to vector<1x128xf32>
    %144 = vector.broadcast %143 : vector<1x128xf32> to vector<16x128xf32>
    %145 = arith.subf %144, %15 : vector<16x128xf32>
    %cst_35 = arith.constant 0.000000e+00 : f32
    %146 = vector.broadcast %cst_35 : f32 to vector<16x128xf32>
    %147 = arith.cmpf olt, %145, %146 : vector<16x128xf32>
    %cst_36 = arith.constant 0xFF800000 : f32
    %148 = vector.broadcast %cst_36 : f32 to vector<16x128xf32>
    %149 = arith.select %147, %145, %148 : vector<16x128xi1>, vector<16x128xf32>
    %150 = math.exp %149 : vector<16x128xf32>
    %151 = arith.addf %142, %150 : vector<16x128xf32>
    %152 = vector.extract_strided_slice %15 {offsets = [15, 0], sizes = [1, 128], strides = [1, 1]} : vector<16x128xf32> to vector<1x128xf32>
    %153 = vector.broadcast %152 : vector<1x128xf32> to vector<16x128xf32>
    %154 = arith.subf %153, %15 : vector<16x128xf32>
    %cst_37 = arith.constant 0.000000e+00 : f32
    %155 = vector.broadcast %cst_37 : f32 to vector<16x128xf32>
    %156 = arith.cmpf olt, %154, %155 : vector<16x128xf32>
    %cst_38 = arith.constant 0xFF800000 : f32
    %157 = vector.broadcast %cst_38 : f32 to vector<16x128xf32>
    %158 = arith.select %156, %154, %157 : vector<16x128xi1>, vector<16x128xf32>
    %159 = math.exp %158 : vector<16x128xf32>
    %160 = arith.addf %151, %159 : vector<16x128xf32>
    %c0_39 = arith.constant 0 : index
    %c0_40 = arith.constant 0 : index
    %161 = vector.load %arg3[%c0_39, %c0_40] : memref<16x128xf32, #tpu.memory_space<vmem>>, vector<16x128xf32>
    tpu.vector_store %arg3[%c0_39, %c0_40], %160 {strides = array<i32>} : memref<16x128xf32, #tpu.memory_space<vmem>>, vector<16x128xf32>,
    return
  }
  func.func @transform_0(%arg0: i32) -> i32 {
    %c0_i32 = arith.constant 0 : i32
    %c0_i32_0 = arith.constant 0 : i32
    return %c0_i32 : i32
  }
  func.func @transform_1(%arg0: i32) -> (i32, i32) {
    %c0_i32 = arith.constant 0 : i32
    %c0_i32_0 = arith.constant 0 : i32
    return %c0_i32, %arg0 : i32, i32
  }
  func.func @transform_2(%arg0: i32) -> (i32, i32) {
    %c0_i32 = arith.constant 0 : i32
    %c0_i32_0 = arith.constant 0 : i32
    return %c0_i32, %arg0 : i32, i32
  }
  func.func @transform_3(%arg0: i32) -> (i32, i32) {
    %c0_i32 = arith.constant 0 : i32
    %c0_i32_0 = arith.constant 0 : i32
    return %c0_i32, %arg0 : i32, i32
  }
}

</mosaic_0001>

<llo_original>
// kernel: tpu_custom_call.1
$region0: #{tpu_custom_call.1}
  #allocation0 [shape = 'u32[]', space=smem, size = 0x4, offset = 0x4, fixed_abs, tag = 'smem constant byte address 0x4 - core index']
  #allocation1 [shape = 'u32[72,128]{1,0:T(1,128)}', space=vmem, size = 0x9000, scoped, tag = 'internal scratch']
  %s0 = inlined_call_operand.hbm [shape: f32[3], index: 0, kind: input, shape index: {}]
  %s1 = inlined_call_operand.hbm [shape: f32[16,128], index: 1, kind: input, shape index: {}]
  %s2 = inlined_call_operand.hbm [shape: f32[16,128], index: 2, kind: output, shape index: {0}]
  %s3 = inlined_call_operand.hbm [shape: f32[1,128], index: 3, kind: output, shape index: {1}]
  %4 = xla_tuple %s2, %s3
  %s5 = sld [smem:[#allocation0]]
  $region34: #{tpu_custom_call.1} parent=0
    _
  %s7 = ssub.s32 1, %s5
  %s8 = scalar_select 0, %s7, %s5
  $region1: #{tpu_custom_call.1} parent=0
    #allocation2 [shape = 'u8[512]{0}', space=smem, size = 0x200, scoped, tag = 'input window, operand 0, single buffered']
    #allocation3 [shape = 's32[1]{0}', space=sflag, size = 0x4, scoped, tag = 'scoped memory for tpu_custom_call.1']
    #allocation4 [shape = 's32[1]{0}', space=sflag, size = 0x4, scoped, tag = 'scoped memory for tpu_custom_call.1']
    #allocation5 [shape = 's32[1]{0}', space=sflag, size = 0x4, scoped, tag = 'scoped memory for tpu_custom_call.1']
    #allocation6 [shape = 'u8[8192]{0}', space=vmem, size = 0x2000, scoped, tag = 'input window, operand 1, single buffered']
    #allocation7 [shape = 'u8[8192]{0}', space=vmem, size = 0x2000, scoped, tag = 'output window, operand 0, single buffered']
    #allocation8 [shape = 'u8[512]{0}', space=vmem, size = 0x400, scoped, tag = 'output window, operand 1, single buffered']
    #allocation9 [shape = 's32[1]{0}', space=sflag, size = 0x4, scoped, tag = 'scoped memory for tpu_custom_call.1']
    %9 = vsyncpa [#allocation5], 0
    %10 = vsyncpa [#allocation3], 0
    %11 = vsyncpa [#allocation4], 0
    %12 = vsyncpa [#allocation9], 0
    // Predicated region
    $region2: #{tpu_custom_call.1} parent=1 // pred_check
      _
    $region3: #{tpu_custom_call.1} parent=1 // pred_check_branch
      %14 = sbr.rel (0) target = $region5
    $region4: #{tpu_custom_call.1} parent=1 // pred_region
      %16 = vsyncadd [#allocation5], 0
      %s18 = sshll.u32 %s0, 4
      %s19 = int_to_ptr.hbm [resolvable:$true] %s18
      %21 = dma.hbm_to_smem %s19, 16, [#allocation2], [#allocation5]
    $region5: #{tpu_custom_call.1} parent=1 // pred_fallthru
      _
    // Predicated region
    $region6: #{tpu_custom_call.1} parent=1 // pred_check
      _
    $region7: #{tpu_custom_call.1} parent=1 // pred_check_branch
      %23 = sbr.rel (0) target = $region9
    $region8: #{tpu_custom_call.1} parent=1 // pred_region
      %25 = vsyncadd [#allocation3], 0
      %s26 = sshll.u32 %s1, 4
      %s27 = int_to_ptr.hbm [resolvable:$true] %s26
      %s28 = sshll.u32 [#allocation6], 4
      %s29 = int_to_ptr.vmem [resolvable:$true] %s28
      %34 = dma.hbm_to_vmem [thread:$0]  %s27, 256, %s29, [#allocation3], 128, 128, 8
    $region9: #{tpu_custom_call.1} parent=1 // pred_fallthru
      _
    // Predicated region
    $region10: #{tpu_custom_call.1} parent=1 // pred_check
      _
    $region11: #{tpu_custom_call.1} parent=1 // pred_check_branch
      %36 = sbr.rel (0) target = $region13
    $region12: #{tpu_custom_call.1} parent=1 // pred_region
      %38 = dma.done [#allocation5], 16
    $region13: #{tpu_custom_call.1} parent=1 // pred_fallthru
      _
    // Predicated region
    $region14: #{tpu_custom_call.1} parent=1 // pred_check
      _
    $region15: #{tpu_custom_call.1} parent=1 // pred_check_branch
      %40 = sbr.rel (0) target = $region17
    $region16: #{tpu_custom_call.1} parent=1 // pred_region
      %42 = dma.done [#allocation3], 256
    $region17: #{tpu_custom_call.1} parent=1 // pred_fallthru
      _
    %43 = sfence
    %s44 = sld [smem:[#allocation2]]
    %s45 = sld [smem:[#allocation2 + $0x2]]
    %v46 = vld [vmem:[#allocation6] sm:$0xff]
    %v47 = vld [vmem:[#allocation6 + $0x8] sm:$0xff]
    %s48 = ssub.f32 0.0, %s44
    %v49 = vstv %s45
    %v50 = vsub.f32 %v49, %v46
    %v51 = vsub.f32 %v49, %v47
    %v52 = vstv %s48
    %v53 = vmul.f32 %v52, %v50
    %v54 = vmul.f32 %v52, %v51
    %v55 = vmul.f32 %v53, 1.442695
    %v56 = vpow.pop %v55
    %v57 = vmul.f32 %v54, 1.442695
    %v58 = vpow.pop %v57
    %v59 = vsub.f32 1.0, %v56
    %v60 = vsub.f32 1.0, %v58
    %v61 = vadd.f32 %v59, %v60
    %v62 = vrot.slane %v61, 4
    %v63 = vadd.f32 %v61, %v62
    %v64 = vrot.slane %v63, 2
    %v65 = vadd.f32 %v63, %v64
    %v66 = vrot.slane %v65, 1
    %v67 = vadd.f32 %v65, %v66
    %68 = vst [vmem:[#allocation8] sm:$0x1] %v67
    %v69 = vstv %s44
    %v70 = vmul.f32 %v69, %v46
    %v71 = vmul.f32 %v69, %v47
    %v72 = vperm.slane %v70, 0
    %v73 = vsub.f32 %v72, %v70
    %v74 = vsub.f32 %v72, %v71
    %vm75 = vcmp.lt.f32.partialorder %v73, 0.0
    %vm76 = vcmp.lt.f32.partialorder %v74, 0.0
    %v77 = vsel %vm75, %v73, -inf
    %v78 = vsel %vm76, %v74, -inf
    %v79 = vmul.f32 %v77, 1.442695
    %v80 = vpow.pop %v79
    %v81 = vmul.f32 %v78, 1.442695
    %v82 = vpow.pop %v81
    %v83 = vadd.f32 %v80, 0.0
    %v84 = vadd.f32 %v82, 0.0
    %v85 = vperm.slane %v70, 1
    %v86 = vsub.f32 %v85, %v70
    %v87 = vsub.f32 %v85, %v71
    %vm88 = vcmp.lt.f32.partialorder %v86, 0.0
    %vm89 = vcmp.lt.f32.partialorder %v87, 0.0
    %v90 = vsel %vm88, %v86, -inf
    %v91 = vsel %vm89, %v87, -inf
    %v92 = vmul.f32 %v90, 1.442695
    %v93 = vpow.pop %v92
    %v94 = vmul.f32 %v91, 1.442695
    %v95 = vpow.pop %v94
    %v96 = vadd.f32 %v83, %v93
    %v97 = vadd.f32 %v84, %v95
    %v98 = vperm.slane %v70, 2
    %v99 = vsub.f32 %v98, %v70
    %v100 = vsub.f32 %v98, %v71
    %vm101 = vcmp.lt.f32.partialorder %v99, 0.0
    %vm102 = vcmp.lt.f32.partialorder %v100, 0.0
    %v103 = vsel %vm101, %v99, -inf
    %v104 = vsel %vm102, %v100, -inf
    %v105 = vmul.f32 %v103, 1.442695
    %v106 = vpow.pop %v105
    %v107 = vmul.f32 %v104, 1.442695
    %v108 = vpow.pop %v107
    %v109 = vadd.f32 %v96, %v106
    %v110 = vadd.f32 %v97, %v108
    %v111 = vperm.slane %v70, 3
    %v112 = vsub.f32 %v111, %v70
    %v113 = vsub.f32 %v111, %v71
    %vm114 = vcmp.lt.f32.partialorder %v112, 0.0
    %vm115 = vcmp.lt.f32.partialorder %v113, 0.0
    %v116 = vsel %vm114, %v112, -inf
    %v117 = vsel %vm115, %v113, -inf
    %v118 = vmul.f32 %v116, 1.442695
    %v119 = vpow.pop %v118
    %v120 = vmul.f32 %v117, 1.442695
    %v121 = vpow.pop %v120
    %v122 = vadd.f32 %v109, %v119
    %v123 = vadd.f32 %v110, %v121
    %v124 = vperm.slane %v70, 4
    %v125 = vsub.f32 %v124, %v70
    %v126 = vsub.f32 %v124, %v71
    %vm127 = vcmp.lt.f32.partialorder %v125, 0.0
    %vm128 = vcmp.lt.f32.partialorder %v126, 0.0
    %v129 = vsel %vm127, %v125, -inf
    %v130 = vsel %vm128, %v126, -inf
    %v131 = vmul.f32 %v129, 1.442695
    %v132 = vpow.pop %v131
    %v133 = vmul.f32 %v130, 1.442695
    %v134 = vpow.pop %v133
    %v135 = vadd.f32 %v122, %v132
    %v136 = vadd.f32 %v123, %v134
    %v137 = vperm.slane %v70, 5
    %v138 = vsub.f32 %v137, %v70
    %v139 = vsub.f32 %v137, %v71
    %vm140 = vcmp.lt.f32.partialorder %v138, 0.0
    %vm141 = vcmp.lt.f32.partialorder %v139, 0.0
    %v142 = vsel %vm140, %v138, -inf
    %v143 = vsel %vm141, %v139, -inf
    %v144 = vmul.f32 %v142, 1.442695
    %v145 = vpow.pop %v144
    %v146 = vmul.f32 %v143, 1.442695
    %v147 = vpow.pop %v146
    %v148 = vadd.f32 %v135, %v145
    %v149 = vadd.f32 %v136, %v147
    %v150 = vperm.slane %v70, 6
    %v151 = vsub.f32 %v150, %v70
    %v152 = vsub.f32 %v150, %v71
    %vm153 = vcmp.lt.f32.partialorder %v151, 0.0
    %vm154 = vcmp.lt.f32.partialorder %v152, 0.0
    %v155 = vsel %vm153, %v151, -inf
    %v156 = vsel %vm154, %v152, -inf
    %v157 = vmul.f32 %v155, 1.442695
    %v158 = vpow.pop %v157
    %v159 = vmul.f32 %v156, 1.442695
    %v160 = vpow.pop %v159
    %v161 = vadd.f32 %v148, %v158
    %v162 = vadd.f32 %v149, %v160
    %v163 = vperm.slane %v70, 7
    %v164 = vsub.f32 %v163, %v70
    %v165 = vsub.f32 %v163, %v71
    %vm166 = vcmp.lt.f32.partialorder %v164, 0.0
    %vm167 = vcmp.lt.f32.partialorder %v165, 0.0
    %v168 = vsel %vm166, %v164, -inf
    %v169 = vsel %vm167, %v165, -inf
    %v170 = vmul.f32 %v168, 1.442695
    %v171 = vpow.pop %v170
    %v172 = vmul.f32 %v169, 1.442695
    %v173 = vpow.pop %v172
    %v174 = vadd.f32 %v161, %v171
    %v175 = vadd.f32 %v162, %v173
    %v176 = vperm.slane %v71, 0
    %v177 = vsub.f32 %v176, %v70
    %v178 = vsub.f32 %v176, %v71
    %vm179 = vcmp.lt.f32.partialorder %v177, 0.0
    %vm180 = vcmp.lt.f32.partialorder %v178, 0.0
    %v181 = vsel %vm179, %v177, -inf
    %v182 = vsel %vm180, %v178, -inf
    %v183 = vmul.f32 %v181, 1.442695
    %v184 = vpow.pop %v183
    %v185 = vmul.f32 %v182, 1.442695
    %v186 = vpow.pop %v185
    %v187 = vadd.f32 %v174, %v184
    %v188 = vadd.f32 %v175, %v186
    %v189 = vperm.slane %v71, 1
    %v190 = vsub.f32 %v189, %v70
    %v191 = vsub.f32 %v189, %v71
    %vm192 = vcmp.lt.f32.partialorder %v190, 0.0
    %vm193 = vcmp.lt.f32.partialorder %v191, 0.0
    %v194 = vsel %vm192, %v190, -inf
    %v195 = vsel %vm193, %v191, -inf
    %v196 = vmul.f32 %v194, 1.442695
    %v197 = vpow.pop %v196
    %v198 = vmul.f32 %v195, 1.442695
    %v199 = vpow.pop %v198
    %v200 = vadd.f32 %v187, %v197
    %v201 = vadd.f32 %v188, %v199
    %v202 = vperm.slane %v71, 2
    %v203 = vsub.f32 %v202, %v70
    %v204 = vsub.f32 %v202, %v71
    %vm205 = vcmp.lt.f32.partialorder %v203, 0.0
    %vm206 = vcmp.lt.f32.partialorder %v204, 0.0
    %v207 = vsel %vm205, %v203, -inf
    %v208 = vsel %vm206, %v204, -inf
    %v209 = vmul.f32 %v207, 1.442695
    %v210 = vpow.pop %v209
    %v211 = vmul.f32 %v208, 1.442695
    %v212 = vpow.pop %v211
    %v213 = vadd.f32 %v200, %v210
    %v214 = vadd.f32 %v201, %v212
    %v215 = vperm.slane %v71, 3
    %v216 = vsub.f32 %v215, %v70
    %v217 = vsub.f32 %v215, %v71
    %vm218 = vcmp.lt.f32.partialorder %v216, 0.0
    %vm219 = vcmp.lt.f32.partialorder %v217, 0.0
    %v220 = vsel %vm218, %v216, -inf
    %v221 = vsel %vm219, %v217, -inf
    %v222 = vmul.f32 %v220, 1.442695
    %v223 = vpow.pop %v222
    %v224 = vmul.f32 %v221, 1.442695
    %v225 = vpow.pop %v224
    %v226 = vadd.f32 %v213, %v223
    %v227 = vadd.f32 %v214, %v225
    %v228 = vperm.slane %v71, 4
    %v229 = vsub.f32 %v228, %v70
    %v230 = vsub.f32 %v228, %v71
    %vm231 = vcmp.lt.f32.partialorder %v229, 0.0
    %vm232 = vcmp.lt.f32.partialorder %v230, 0.0
    %v233 = vsel %vm231, %v229, -inf
    %v234 = vsel %vm232, %v230, -inf
    %v235 = vmul.f32 %v233, 1.442695
    %v236 = vpow.pop %v235
    %v237 = vmul.f32 %v234, 1.442695
    %v238 = vpow.pop %v237
    %v239 = vadd.f32 %v226, %v236
    %v240 = vadd.f32 %v227, %v238
    %v241 = vperm.slane %v71, 5
    %v242 = vsub.f32 %v241, %v70
    %v243 = vsub.f32 %v241, %v71
    %vm244 = vcmp.lt.f32.partialorder %v242, 0.0
    %vm245 = vcmp.lt.f32.partialorder %v243, 0.0
    %v246 = vsel %vm244, %v242, -inf
    %v247 = vsel %vm245, %v243, -inf
    %v248 = vmul.f32 %v246, 1.442695
    %v249 = vpow.pop %v248
    %v250 = vmul.f32 %v247, 1.442695
    %v251 = vpow.pop %v250
    %v252 = vadd.f32 %v239, %v249
    %v253 = vadd.f32 %v240, %v251
    %v254 = vperm.slane %v71, 6
    %v255 = vsub.f32 %v254, %v70
    %v256 = vsub.f32 %v254, %v71
    %vm257 = vcmp.lt.f32.partialorder %v255, 0.0
    %vm258 = vcmp.lt.f32.partialorder %v256, 0.0
    %v259 = vsel %vm257, %v255, -inf
    %v260 = vsel %vm258, %v256, -inf
    %v261 = vmul.f32 %v259, 1.442695
    %v262 = vpow.pop %v261
    %v263 = vmul.f32 %v260, 1.442695
    %v264 = vpow.pop %v263
    %v265 = vadd.f32 %v252, %v262
    %v266 = vadd.f32 %v253, %v264
    %v267 = vperm.slane %v71, 7
    %v268 = vsub.f32 %v267, %v70
    %v269 = vsub.f32 %v267, %v71
    %vm270 = vcmp.lt.f32.partialorder %v268, 0.0
    %vm271 = vcmp.lt.f32.partialorder %v269, 0.0
    %v272 = vsel %vm270, %v268, -inf
    %v273 = vsel %vm271, %v269, -inf
    %v274 = vmul.f32 %v272, 1.442695
    %v275 = vpow.pop %v274
    %v276 = vmul.f32 %v273, 1.442695
    %v277 = vpow.pop %v276
    %v278 = vadd.f32 %v265, %v275
    %v279 = vadd.f32 %v266, %v277
    %280 = vst [vmem:[#allocation7] sm:$0xff] %v278
    %281 = vst [vmem:[#allocation7 + $0x8] sm:$0xff] %v279
    // Predicated region
    $region18: #{tpu_custom_call.1} parent=1 // pred_check
      _
    $region19: #{tpu_custom_call.1} parent=1 // pred_check_branch
      %283 = sbr.rel (0) target = $region21
    $region20: #{tpu_custom_call.1} parent=1 // pred_region
      %285 = vsyncadd [#allocation4], 0
      %s286 = sshll.u32 [#allocation7], 4
      %s287 = int_to_ptr.vmem [resolvable:$true] %s286
      %s288 = sshll.u32 %s2, 4
      %s289 = int_to_ptr.hbm [resolvable:$true] %s288
      %294 = dma.vmem_to_hbm [thread:$0]  %s287, 256, %s289, [#allocation4], 128, 128, 8
    $region21: #{tpu_custom_call.1} parent=1 // pred_fallthru
      _
    // Predicated region
    $region22: #{tpu_custom_call.1} parent=1 // pred_check
      _
    $region23: #{tpu_custom_call.1} parent=1 // pred_check_branch
      %296 = sbr.rel (0) target = $region25
    $region24: #{tpu_custom_call.1} parent=1 // pred_region
      %298 = vsyncadd [#allocation9], 0
      %s300 = sshll.u32 [#allocation8], 4
      %s301 = int_to_ptr.vmem [resolvable:$true] %s300
      %s302 = sshll.u32 %s3, 4
      %s303 = int_to_ptr.hbm [resolvable:$true] %s302
      %305 = dma.vmem_to_hbm [thread:$0]  %s301, 16, %s303, [#allocation9]
    $region25: #{tpu_custom_call.1} parent=1 // pred_fallthru
      _
    // Predicated region
    $region26: #{tpu_custom_call.1} parent=1 // pred_check
      _
    $region27: #{tpu_custom_call.1} parent=1 // pred_check_branch
      %307 = sbr.rel (0) target = $region29
    $region28: #{tpu_custom_call.1} parent=1 // pred_region
      %309 = dma.done [#allocation4], 256
    $region29: #{tpu_custom_call.1} parent=1 // pred_fallthru
      _
    // Predicated region
    $region30: #{tpu_custom_call.1} parent=1 // pred_check
      _
    $region31: #{tpu_custom_call.1} parent=1 // pred_check_branch
      %311 = sbr.rel (0) target = $region33
    $region32: #{tpu_custom_call.1} parent=1 // pred_region
      %313 = dma.done [#allocation9], 16
    $region33: #{tpu_custom_call.1} parent=1 // pred_fallthru
      _
    %314 = vsyncpa [#allocation3], 1
    %315 = vsyncpa [#allocation4], 1
    %316 = vsyncpa [#allocation9], 1
    %317 = vsyncpa [#allocation5], 1

</llo_original>
